<compile_context>
chip_gen: v7x
topology: tpu7x:2x2x1
jax: 0.10.0
libtpu: 0.0.40
codegen_flags: <defaults>
</compile_context>

<pallas_src>
import functools

import jax
import jax.numpy as jnp
from jax.experimental import pallas as pl
from jax.experimental.pallas import tpu as pltpu


def _round_up(a: int, m: int) -> int:
    return ((a + m - 1) // m) * m


def _attention_block2_kernel(x_ref, w0_ref, b0_ref, w1_ref, out_ref, *, chunk):
    """One grid step: B samples of (S, F) -> (B, S) softmax attention weights.

    x_ref:   (B, S, F)  one DMA slab of B samples' segment features
    w0_ref:  (F, H)     first Linear weight (grid-resident)
    b0_ref:  (1, H)     first Linear bias
    w1_ref:  (1, H)     second Linear weight as a row (the H -> 1 projection)
    out_ref: (B, S)     per-sample softmax over segments
    chunk:   samples per inner compute tile (static; divides B)
    """
    B, S, F = x_ref.shape
    H = w0_ref.shape[1]
    assert B % chunk == 0
    n_chunks = B // chunk

    def body(c, carry):
        base = pl.multiple_of(c * chunk, chunk)
        xb = x_ref[pl.ds(base, chunk), :, :]                      # (chunk, S, F)

        # Linear(F -> H) + ReLU as one (chunk*S, F) @ (F, H) MXU matmul.
        h = jnp.dot(xb.reshape(chunk * S, F), w0_ref[...],
                    preferred_element_type=jnp.float32)           # (chunk*S, H)
        h = jnp.maximum(h + b0_ref[...], 0.0)

        # Linear(H -> 1) as a VPU multiply + lane reduce (no 1-column MXU op).
        # b1 omitted: softmax over segments is invariant to that scalar shift.
        scores = jnp.sum(h.reshape(chunk, S, H) * w1_ref[...], axis=-1)  # (chunk,S)

        # Softmax over the segment axis (exact divide: rows sum to 1).
        m = jnp.max(scores, axis=-1, keepdims=True)
        e = jnp.exp(scores - m)
        denom = jnp.sum(e, axis=-1, keepdims=True)
        out_ref[pl.ds(base, chunk), :] = (e / denom).astype(out_ref.dtype)
        return carry

    jax.lax.fori_loop(0, n_chunks, body, 0, unroll=(n_chunks <= 8))


def attention_block2(x, w0, b0, w1, b1=None, *,
                     block_samples=None, chunk_samples=256):
    """AttentionBlock2 forward: x (N, S, F) -> attention weights (N, S, 1).

    b1 is accepted for parameter parity with the PyTorch module but unused:
    softmax over dim=1 is invariant to that scalar shift.
    """
    del b1  # mathematically a no-op under softmax over dim=1
    N, S, F = x.shape
    H = w0.shape[1]

    # ---- choose per-grid-step sample count B and inner compute chunk -------
    # The op is HBM-bound (~16 flops/byte), so B mostly has to be large enough
    # to amortize the ~0.35 us per-step overhead without exhausting VMEM.
    if block_samples is None:
        block_samples = 2048
    B = max(1, min(int(block_samples), N))
    if B < N:
        B = max(8, (B // 8) * 8)          # partial-batch tiles: sublane-align
    chunk = max(1, min(int(chunk_samples), B))
    if chunk < B:
        chunk = max(8, (chunk // 8) * 8)  # keep dynamic stores sublane-aligned
        B = (B // chunk) * chunk          # inner loop requires chunk | B
    # Prefer >= 2 grid steps so the "parallel" axis can use both v7x TCs.
    if N >= 2 * chunk and B >= N:
        B = _round_up(pl.cdiv(N, 2), chunk)
    n_blocks = pl.cdiv(N, B)              # ragged N: Pallas masks edge blocks

    # ---- small resident parameters ------------------------------------------
    w0_c = w0.astype(x.dtype)                        # matmul in x's dtype
    b0_row = b0.reshape(1, H).astype(jnp.float32)
    w1_row = w1.reshape(1, H).astype(jnp.float32)    # (H, 1) -> (1, H) row

    # ---- VMEM budget (lane/sublane-padded tiles, double-buffered) -----------
    lane, sub = 128, 8
    itemsize = x.dtype.itemsize
    x_tile = B * _round_up(S, sub) * _round_up(F, lane) * itemsize
    out_tile = _round_up(B, sub) * _round_up(S, lane) * itemsize
    h_tile = _round_up(chunk * S, sub) * _round_up(H, lane) * 4
    w_tile = _round_up(F, sub) * _round_up(H, lane) * itemsize
    est = 2 * x_tile + 2 * out_tile + 6 * h_tile + 2 * w_tile + (2 << 20)
    vmem_limit = int(min(max(est, 32 << 20), 48 << 20))  # < v7x's 64 MiB/TC

    out = pl.pallas_call(
        functools.partial(_attention_block2_kernel, chunk=chunk),
        out_shape=jax.ShapeDtypeStruct((N, S), x.dtype),
        grid=(n_blocks,),
        in_specs=[
            pl.BlockSpec((B, S, F), lambda i: (i, 0, 0)),   # x slab per step
            pl.BlockSpec((F, H), lambda i: (0, 0)),         # W0 (resident)
            pl.BlockSpec((1, H), lambda i: (0, 0)),         # b0
            pl.BlockSpec((1, H), lambda i: (0, 0)),         # w1 row
        ],
        out_specs=pl.BlockSpec((B, S), lambda i: (i, 0)),
        compiler_params=pltpu.CompilerParams(
            dimension_semantics=("parallel",),
            vmem_limit_bytes=vmem_limit,
        ),
    )(x, w0_c, b0_row, w1_row)

    return out.reshape(N, S, 1)


def attention_block2_ref(x, w0, b0, w1, b1):
    """Pure-JAX reference mirroring the PyTorch module (high-precision matmuls)."""
    N, S, F = x.shape
    flat = x.reshape(N * S, F)
    h = jnp.maximum(
        jnp.dot(flat, w0, precision=jax.lax.Precision.HIGHEST) + b0, 0.0)
    scores = jnp.dot(h, w1, precision=jax.lax.Precision.HIGHEST) + b1
    return jax.nn.softmax(scores.reshape(N, S, 1), axis=1)


if __name__ == "__main__":
    # Shapes consistent with the module: batch=2, segments=8, features=32,
    # hidden defaults to num_in_features (=32).
    N, S, F = 2, 8, 32
    H = F

    key = jax.random.PRNGKey(0)
    kx, k0, kb0, k1, kb1, kx2 = jax.random.split(key, 6)

    x = jax.random.normal(kx, (N, S, F), dtype=jnp.float32)
    # Deterministic synthetic parameters (not a checkpoint load).
    w0 = jax.random.normal(k0, (F, H), dtype=jnp.float32) * 0.1
    b0 = jax.random.normal(kb0, (H,), dtype=jnp.float32) * 0.1
    w1 = jax.random.normal(k1, (H, 1), dtype=jnp.float32) * 0.1
    b1 = jax.random.normal(kb1, (1,), dtype=jnp.float32) * 0.1

    out = jax.block_until_ready(attention_block2(x, w0, b0, w1, b1))
    ref = attention_block2_ref(x, w0, b0, w1, b1)
    assert out.shape == (N, S, 1)
    assert jnp.allclose(out, ref, atol=2e-3, rtol=2e-3)
    # Exact divide -> each sample's attention weights sum to 1.
    assert jnp.allclose(jnp.sum(out, axis=1), jnp.ones((N, 1)), atol=1e-3)

    # Second case: exercises the multi-step grid, a partial (masked) last
    # block (130 = 2*64 + 2, no wrapper pad), and the inner chunk loop
    # (64 / 32 = 2 chunks per step).
    N2 = 130
    x2 = jax.random.normal(kx2, (N2, S, F), dtype=jnp.float32)
    out2 = jax.block_until_ready(
        attention_block2(x2, w0, b0, w1, b1, block_samples=64, chunk_samples=32))
    ref2 = attention_block2_ref(x2, w0, b0, w1, b1)
    assert out2.shape == (N2, S, 1)
    assert jnp.allclose(out2, ref2, atol=2e-3, rtol=2e-3)
    assert jnp.allclose(jnp.sum(out2, axis=1), jnp.ones((N2, 1)), atol=1e-3)

    print("KERNEL_OK")
</pallas_src>

<mosaic_0001>
module attributes {stable_mosaic.version = 11 : i64} {
  func.func @_attention_block2_kernel(%arg0: i32, %arg1: memref<2x8x32xf32, #tpu.memory_space<vmem>>, %arg2: memref<32x32xf32, #tpu.memory_space<vmem>>, %arg3: memref<1x32xf32, #tpu.memory_space<vmem>>, %arg4: memref<1x32xf32, #tpu.memory_space<vmem>>, %arg5: memref<2x8xf32, #tpu.memory_space<vmem>>) attributes {dimension_semantics = [#tpu.dimension_semantics<parallel>], iteration_bounds = array<i64: 1>, scalar_prefetch = 0 : i64, scratch_operands = 0 : i64, tpu.core_type = #tpu.core_type<tc>, window_params = [{transform_indices = @transform_0, window_bounds = array<i64: 2, 8, 32>}, {pipeline_mode = #tpu.pipeline_mode<synchronous>, transform_indices = @transform_1, window_bounds = array<i64: 32, 32>}, {pipeline_mode = #tpu.pipeline_mode<synchronous>, transform_indices = @transform_2, window_bounds = array<i64: 1, 32>}, {pipeline_mode = #tpu.pipeline_mode<synchronous>, transform_indices = @transform_3, window_bounds = array<i64: 1, 32>}, {transform_indices = @transform_4, window_bounds = array<i64: 2, 8>}]} {
    %c0_i32 = arith.constant 0 : i32
    %c2_i32 = arith.constant 2 : i32
    %0 = arith.muli %c0_i32, %c2_i32 : i32
    %1 = tpu.assume_multiple %0, 2 : i32
    %2 = arith.index_cast %1 : i32 to index
    %c0 = arith.constant 0 : index
    %c0_0 = arith.constant 0 : index
    %3 = vector.load %arg1[%2, %c0, %c0_0] : memref<2x8x32xf32, #tpu.memory_space<vmem>>, vector<2x8x32xf32>
    %4 = vector.shape_cast %3 : vector<2x8x32xf32> to vector<16x32xf32>
    %c0_1 = arith.constant 0 : index
    %c0_2 = arith.constant 0 : index
    %5 = vector.load %arg2[%c0_1, %c0_2] : memref<32x32xf32, #tpu.memory_space<vmem>>, vector<32x32xf32>
    %cst = arith.constant dense<0.000000e+00> : vector<16x32xf32>
    %6 = tpu.matmul %4, %5, %cst {dimension_numbers = #tpu.dot_dimension_numbers<[1], [0], [0], [1], [0, 0, 1, 1], [], []>} : vector<16x32xf32>, vector<32x32xf32>, vector<16x32xf32> -> vector<16x32xf32>
    %c0_3 = arith.constant 0 : index
    %c0_4 = arith.constant 0 : index
    %7 = vector.load %arg3[%c0_3, %c0_4] : memref<1x32xf32, #tpu.memory_space<vmem>>, vector<1x32xf32>
    %8 = vector.broadcast %7 : vector<1x32xf32> to vector<16x32xf32>
    %9 = arith.addf %6, %8 : vector<16x32xf32>
    %cst_5 = arith.constant 0.000000e+00 : f32
    %10 = vector.broadcast %cst_5 : f32 to vector<16x32xf32>
    %11 = arith.maximumf %9, %10 : vector<16x32xf32>
    %12 = vector.shape_cast %11 : vector<16x32xf32> to vector<2x8x32xf32>
    %c0_6 = arith.constant 0 : index
    %c0_7 = arith.constant 0 : index
    %13 = vector.load %arg4[%c0_6, %c0_7] : memref<1x32xf32, #tpu.memory_space<vmem>>, vector<1x32xf32>
    %14 = vector.shape_cast %13 : vector<1x32xf32> to vector<1x1x32xf32>
    %15 = vector.broadcast %14 : vector<1x1x32xf32> to vector<2x8x32xf32>
    %16 = arith.mulf %12, %15 : vector<2x8x32xf32>
    %cst_8 = arith.constant dense<0.000000e+00> : vector<2x8xf32>
    %17 = vector.multi_reduction <add>, %16, %cst_8 [2] : vector<2x8x32xf32> to vector<2x8xf32>
    %cst_9 = arith.constant dense<0xFF800000> : vector<2xf32>
    %18 = vector.multi_reduction <maximumf>, %17, %cst_9 [1] : vector<2x8xf32> to vector<2xf32>
    %19 = vector.shape_cast %18 : vector<2xf32> to vector<2x1xf32>
    %20 = vector.broadcast %19 : vector<2x1xf32> to vector<2x8xf32>
    %21 = arith.subf %17, %20 : vector<2x8xf32>
    %22 = math.exp %21 : vector<2x8xf32>
    %cst_10 = arith.constant dense<0.000000e+00> : vector<2xf32>
    %23 = vector.multi_reduction <add>, %22, %cst_10 [1] : vector<2x8xf32> to vector<2xf32>
    %24 = vector.shape_cast %23 : vector<2xf32> to vector<2x1xf32>
    %25 = vector.broadcast %24 : vector<2x1xf32> to vector<2x8xf32>
    %26 = arith.divf %22, %25 : vector<2x8xf32>
    %27 = arith.index_cast %1 : i32 to index
    %c0_11 = arith.constant 0 : index
    %28 = vector.load %arg5[%27, %c0_11] : memref<2x8xf32, #tpu.memory_space<vmem>>, vector<2x8xf32>
    tpu.vector_store %arg5[%27, %c0_11], %26 {strides = array<i32>} : memref<2x8xf32, #tpu.memory_space<vmem>>, vector<2x8xf32>,
    %c1_i32 = arith.constant 1 : i32
    return
  }
  func.func @transform_0(%arg0: i32) -> (i32, i32, i32) {
    %c0_i32 = arith.constant 0 : i32
    %c0_i32_0 = arith.constant 0 : i32
    %c0_i32_1 = arith.constant 0 : i32
    return %arg0, %c0_i32, %c0_i32_0 : i32, i32, i32
  }
  func.func @transform_1(%arg0: i32) -> (i32, i32) {
    %c0_i32 = arith.constant 0 : i32
    %c0_i32_0 = arith.constant 0 : i32
    %c0_i32_1 = arith.constant 0 : i32
    return %c0_i32, %c0_i32_0 : i32, i32
  }
  func.func @transform_2(%arg0: i32) -> (i32, i32) {
    %c0_i32 = arith.constant 0 : i32
    %c0_i32_0 = arith.constant 0 : i32
    %c0_i32_1 = arith.constant 0 : i32
    return %c0_i32, %c0_i32_0 : i32, i32
  }
  func.func @transform_3(%arg0: i32) -> (i32, i32) {
    %c0_i32 = arith.constant 0 : i32
    %c0_i32_0 = arith.constant 0 : i32
    %c0_i32_1 = arith.constant 0 : i32
    return %c0_i32, %c0_i32_0 : i32, i32
  }
  func.func @transform_4(%arg0: i32) -> (i32, i32) {
    %c0_i32 = arith.constant 0 : i32
    %c0_i32_0 = arith.constant 0 : i32
    return %arg0, %c0_i32 : i32, i32
  }
}

</mosaic_0001>

<llo_original>
// kernel: tpu_custom_call.1
$region0: #{tpu_custom_call.1}
  #allocation0 [shape = 'u32[]', space=smem, size = 0x4, offset = 0x4, fixed_abs, tag = 'smem constant byte address 0x4 - core index']
  #allocation1 [shape = 'u32[144,128]{1,0:T(1,128)}', space=vmem, size = 0x12000, scoped, tag = 'internal scratch']
  %s0 = inlined_call_operand.hbm [shape: f32[2,8,32], index: 0, kind: input, shape index: {}]
  %s1 = inlined_call_operand.hbm [shape: f32[32,32], index: 1, kind: input, shape index: {}]
  %s2 = inlined_call_operand.vmem [shape: f32[1,32], index: 2, kind: input, shape index: {}]
  %s3 = inlined_call_operand.vmem [shape: f32[1,32], index: 3, kind: input, shape index: {}]
  %s4 = inlined_call_operand.hbm [shape: f32[2,8], index: 4, kind: output, shape index: {}]
  %s5 = sld [smem:[#allocation0]]
  $region34: #{tpu_custom_call.1} parent=0
    _
  %s7 = ssub.s32 1, %s5
  %s8 = scalar_select 0, %s7, %s5
  $region1: #{tpu_custom_call.1} parent=0
    #allocation2 [shape = 'u8[8192]{0}', space=vmem, size = 0x2000, scoped, tag = 'input window, operand 0, single buffered']
    #allocation3 [shape = 's32[1]{0}', space=sflag, size = 0x4, scoped, tag = 'scoped memory for tpu_custom_call.1']
    #allocation4 [shape = 's32[1]{0}', space=sflag, size = 0x4, scoped, tag = 'scoped memory for tpu_custom_call.1']
    #allocation5 [shape = 'u8[16384]{0}', space=vmem, size = 0x4000, scoped, tag = 'input window, operand 1, single buffered']
    #allocation6 [shape = 's32[1]{0}', space=sflag, size = 0x4, scoped, tag = 'scoped memory for tpu_custom_call.1']
    #allocation7 [shape = 'u8[1024]{0}', space=vmem, size = 0x400, scoped, tag = 'output window, operand 0, single buffered']
    %9 = vsyncpa [#allocation3], 0
    %10 = vsyncpa [#allocation6], 0
    %11 = vsyncpa [#allocation4], 0
    // Predicated region
    $region2: #{tpu_custom_call.1} parent=1 // pred_check
      _
    $region3: #{tpu_custom_call.1} parent=1 // pred_check_branch
      %13 = sbr.rel (0) target = $region5
    $region4: #{tpu_custom_call.1} parent=1 // pred_region
      %s15 = ssub.s32 256, 256
      %16 = vsyncadd [#allocation3], %s15
      %s17 = sshll.u32 [#allocation2], 4
      %s18 = int_to_ptr.vmem [resolvable:$true] %s17
      %23 = dma.hbm_to_vmem [thread:$0]  %s0, 256, %s18, [#allocation3], 128, 128, 8
    $region5: #{tpu_custom_call.1} parent=1 // pred_fallthru
      _
    // Predicated region
    $region6: #{tpu_custom_call.1} parent=1 // pred_check
      _
    $region7: #{tpu_custom_call.1} parent=1 // pred_check_branch
      %25 = sbr.rel (0) target = $region9
    $region8: #{tpu_custom_call.1} parent=1 // pred_region
      %s27 = ssub.s32 512, 512
      %28 = vsyncadd [#allocation6], %s27
      %s29 = sshll.u32 [#allocation5], 4
      %s30 = int_to_ptr.vmem [resolvable:$true] %s29
      %35 = dma.hbm_to_vmem [thread:$0]  %s1, 512, %s30, [#allocation6], 128, 128, 8
    $region9: #{tpu_custom_call.1} parent=1 // pred_fallthru
      _
    // Predicated region
    $region10: #{tpu_custom_call.1} parent=1 // pred_check
      _
    $region11: #{tpu_custom_call.1} parent=1 // pred_check_branch
      %37 = sbr.rel (0) target = $region13
    $region12: #{tpu_custom_call.1} parent=1 // pred_region
      _
    $region13: #{tpu_custom_call.1} parent=1 // pred_fallthru
      _
    // Predicated region
    $region14: #{tpu_custom_call.1} parent=1 // pred_check
      _
    $region15: #{tpu_custom_call.1} parent=1 // pred_check_branch
      %39 = sbr.rel (0) target = $region17
    $region16: #{tpu_custom_call.1} parent=1 // pred_region
      _
    $region17: #{tpu_custom_call.1} parent=1 // pred_fallthru
      _
    // Predicated region
    $region18: #{tpu_custom_call.1} parent=1 // pred_check
      _
    $region19: #{tpu_custom_call.1} parent=1 // pred_check_branch
      %41 = sbr.rel (0) target = $region21
    $region20: #{tpu_custom_call.1} parent=1 // pred_region
      %42 = dma.done [#allocation3], 256
    $region21: #{tpu_custom_call.1} parent=1 // pred_fallthru
      _
    // Predicated region
    $region22: #{tpu_custom_call.1} parent=1 // pred_check
      _
    $region23: #{tpu_custom_call.1} parent=1 // pred_check_branch
      %44 = sbr.rel (0) target = $region25
    $region24: #{tpu_custom_call.1} parent=1 // pred_region
      %45 = dma.done [#allocation6], 512
    $region25: #{tpu_custom_call.1} parent=1 // pred_fallthru
      _
    %s46 = smul.u32 0, 8
    %s47 = scalar_lea.vmem [#allocation2], %s46
    %v48 = vld [vmem:[%s47] sm:$0xff]
    %v49 = vld [vmem:[%s47 + $0x8] sm:$0xff]
    %v50 = vld [vmem:[#allocation5] sm:$0xff]
    %v51 = vld [vmem:[#allocation5 + $0x8] sm:$0xff]
    %v52 = vld [vmem:[#allocation5 + $0x10] sm:$0xff]
    %v53 = vld [vmem:[#allocation5 + $0x18] sm:$0xff]
    %v54 = vld [vmem:[%s2] sm:$0x1]
    %v56 = vlaneseq
    %v57 = vshrl.u32 %v56, 7
    %v58 = vsub.s32 0, %v57
    %v59 = vrot.slane %v54, %v58
    %vm61 = vcmask 261120
    %v63 = vsel %vm61, %v48, 0
    %v66 = vsel %vm61, %v49, 0
    %68 = vmatprep.subr.mxu0 0.0
    %69 = vmatpush1.msra.mxu0 %v50
    %70 = vmatprep.subr.mxu0 0.0
    %71 = vmatpush1.msra.mxu0 %v51
    %72 = vmatprep.subr.mxu0 0.0
    %73 = vmatpush1.msra.mxu0 %v52
    %74 = vmatprep.subr.mxu0 0.0
    %75 = vmatpush1.msra.mxu0 %v53
    %76 = vmatprep.subr.mxu0 0.0
    %77 = vmatpush1.msra.mxu0 0.0
    %78 = vmatprep.subr.mxu0 0.0
    %79 = vmatpush1.msra.mxu0 0.0
    %80 = vmatprep.subr.mxu0 0.0
    %81 = vmatpush1.msra.mxu0 0.0
    %82 = vmatprep.subr.mxu0 0.0
    %83 = vmatpush1.msra.mxu0 0.0
    %84 = vmatprep.subr.mxu0 0.0
    %85 = vmatpush1.msra.mxu0 0.0
    %86 = vmatprep.subr.mxu0 0.0
    %87 = vmatpush1.msra.mxu0 0.0
    %88 = vmatprep.subr.mxu0 0.0
    %89 = vmatpush1.msra.mxu0 0.0
    %90 = vmatprep.subr.mxu0 0.0
    %91 = vmatpush1.msra.mxu0 0.0
    %92 = vmatprep.subr.mxu0 0.0
    %93 = vmatpush1.msra.mxu0 0.0
    %94 = vmatprep.subr.mxu0 0.0
    %95 = vmatpush1.msra.mxu0 0.0
    %96 = vmatprep.subr.mxu0 0.0
    %97 = vmatpush1.msra.mxu0 0.0
    %98 = vmatprep.subr.mxu0 0.0
    %99 = vmatpush1.msra.mxu0 0.0
    %100 = vmatprep.subr.mxu0 0.0
    %101 = vmatpush1.msra.mxu0 0.0
    %102 = vmatprep.subr.mxu0 0.0
    %103 = vmatpush1.msra.mxu0 0.0
    %104 = vmatprep.subr.mxu0 0.0
    %105 = vmatpush1.msra.mxu0 0.0
    %106 = vmatprep.subr.mxu0 0.0
    %107 = vmatpush1.msra.mxu0 0.0
    %108 = vmatprep.subr.mxu0 0.0
    %109 = vmatpush1.msra.mxu0 0.0
    %110 = vmatprep.subr.mxu0 0.0
    %111 = vmatpush1.msra.mxu0 0.0
    %112 = vmatprep.subr.mxu0 0.0
    %113 = vmatpush1.msra.mxu0 0.0
    %114 = vmatprep.subr.mxu0 0.0
    %115 = vmatpush1.msra.mxu0 0.0
    %116 = vmatprep.subr.mxu0 0.0
    %117 = vmatpush1.msra.mxu0 0.0
    %118 = vmatprep.subr.mxu0 0.0
    %119 = vmatpush1.msra.mxu0 0.0
    %120 = vmatprep.subr.mxu0 0.0
    %121 = vmatpush1.msra.mxu0 0.0
    %122 = vmatprep.subr.mxu0 0.0
    %123 = vmatpush1.msra.mxu0 0.0
    %124 = vmatprep.subr.mxu0 0.0
    %125 = vmatpush1.msra.mxu0 0.0
    %126 = vmatprep.subr.mxu0 0.0
    %127 = vmatpush1.msra.mxu0 0.0
    %128 = vmatprep.subr.mxu0 0.0
    %129 = vmatpush1.msra.mxu0 0.0
    %130 = vmatprep.subr.mxu0 0.0
    %131 = vmatpush1.msra.mxu0 0.0
    %132 = vmatprep.mubr.f32.mxu0 0.0
    %133 = vmatmul.mubr.f32.gmra.mrb[0].mxu0 %v63
    %v134 = vpop.f32.mrb[0].mxu0
    %v135 = vadd.f32 %v59, %v134
    %v136 = vpop.f32.mrb[0].mxu0
    %137 = vmatprep.mubr.f32.mxu0 0.0
    %138 = vmatmul.mubr.f32.gmra.mrb[0].mxu0 %v66
    %v139 = vpop.f32.mrb[0].mxu0
    %v140 = vadd.f32 %v59, %v139
    %v141 = vpop.f32.mrb[0].mxu0
    %142 = vdwg.mxu0
    %v143 = vmax.f32 %v135, 0.0
    %v144 = vmax.f32 %v140, 0.0
    %v145 = vld [vmem:[%s3] sm:$0x1]
    %v147 = vlaneseq
    %v148 = vshrl.u32 %v147, 7
    %v149 = vsub.s32 0, %v148
    %v150 = vrot.slane %v145, %v149
    %v152 = vmul.f32 %v143, %v150
    %v153 = vmul.f32 %v144, %v150
    %v154 = vsel %vm61, %v152, 0.0
    %155 = vadd.xlane.f32.xlu0 %v154
    %v156 = vpop.xlane.xlu0 %155
    %v157 = vsel %vm61, %v153, 0.0
    %158 = vadd.xlane.f32.xlu0 %v157
    %v159 = vpop.xlane.xlu0 %158
    %v162 = vlaneseq
    %v163 = vand.u32 %v162, 127
    %v164 = vlaneseq
    %v165 = vshrl.u32 %v164, 7
    %v166 = vsub.s32 %v163, %v165
    %v167 = vrot.slane %v156, %v166
    %v168 = vlaneseq
    %v169 = vshrl.u32 %v168, 7
    %v170 = vsub.s32 %v163, %v169
    %v171 = vrot.slane %v159, %v170
    %vm172 = vcmask 1041409
    %v173 = vsel %vm172, %v171, %v167
    %vm175 = vcmask 58368
    %v176 = vsel %vm175, %v173, -inf
    %177 = vmax.xlane.f32.xlu0 %v176
    %v178 = vpop.xlane.xlu0 %177
    %v180 = vlaneseq
    %v181 = vshrl.u32 %v180, 7
    %v182 = vsub.s32 0, %v181
    %v183 = vrot.slane %v178, %v182
    %v184 = vlaneseq
    %v185 = vshrl.u32 %v184, 7
    %v186 = vsub.s32 1, %v185
    %v187 = vrot.slane %v178, %v186
    %v190 = vsub.f32 %v156, %v183
    %v191 = vsub.f32 %v159, %v187
    %v192 = vmul.f32 %v190, 1.442695
    %v193 = vpow.pop %v192
    %v194 = vmul.f32 %v191, 1.442695
    %v195 = vpow.pop %v194
    %198 = vset.pattern.permute.xlu0 0
    %199 = vperm.xlu0 %198, %v193
    %v200 = vpop.permute.xlu0 %199
    %201 = vset.pattern.permute.xlu0 0
    %202 = vperm.xlu0 %201, %v195
    %v203 = vpop.permute.xlu0 %202
    %v204 = vlaneseq
    %v205 = vshrl.u32 %v204, 7
    %v206 = vsub.s32 %v163, %v205
    %v207 = vrot.slane %v200, %v206
    %v208 = vlaneseq
    %v209 = vshrl.u32 %v208, 7
    %v210 = vsub.s32 %v163, %v209
    %v211 = vrot.slane %v203, %v210
    %v212 = vsel %vm172, %v211, %v207
    %v214 = vsel %vm175, %v212, 0.0
    %215 = vadd.xlane.f32.xlu0 %v214
    %v216 = vpop.xlane.xlu0 %215
    %v218 = vlaneseq
    %v219 = vshrl.u32 %v218, 7
    %v220 = vsub.s32 0, %v219
    %v221 = vrot.slane %v216, %v220
    %v222 = vlaneseq
    %v223 = vshrl.u32 %v222, 7
    %v224 = vsub.s32 1, %v223
    %v225 = vrot.slane %v216, %v224
    %v228 = vrcp.pop %v221
    %v229 = vmul.f32 %v193, %v228
    %v230 = vrcp.pop %v225
    %v231 = vmul.f32 %v195, %v230
    %234 = vset.pattern.permute.xlu0 0
    %235 = vperm.xlu0 %234, %v229
    %v236 = vpop.permute.xlu0 %235
    %237 = vset.pattern.permute.xlu0 0
    %238 = vperm.xlu0 %237, %v231
    %v239 = vpop.permute.xlu0 %238
    %v240 = vlaneseq
    %v241 = vshrl.u32 %v240, 7
    %v242 = vsub.s32 %v163, %v241
    %v243 = vrot.slane %v236, %v242
    %v244 = vlaneseq
    %v245 = vshrl.u32 %v244, 7
    %v246 = vsub.s32 %v163, %v245
    %v247 = vrot.slane %v239, %v246
    %v248 = vsel %vm172, %v247, %v243
    %250 = vst.msk [vmem:[#allocation7] sm:$0x3] %vm175, %v248
    // Predicated region
    $region26: #{tpu_custom_call.1} parent=1 // pred_check
      _
    $region27: #{tpu_custom_call.1} parent=1 // pred_check_branch
      %252 = sbr.rel (0) target = $region29
    $region28: #{tpu_custom_call.1} parent=1 // pred_region
      %s254 = ssub.s32 32, 32
      %255 = vsyncadd [#allocation4], %s254
      %s257 = sshll.u32 [#allocation7], 4
      %s258 = int_to_ptr.vmem [resolvable:$true] %s257
      %260 = dma.vmem_to_hbm [thread:$0]  %s258, 32, %s4, [#allocation4]
    $region29: #{tpu_custom_call.1} parent=1 // pred_fallthru
      _
    // Predicated region
    $region30: #{tpu_custom_call.1} parent=1 // pred_check
      _
    $region31: #{tpu_custom_call.1} parent=1 // pred_check_branch
      %262 = sbr.rel (0) target = $region33
    $region32: #{tpu_custom_call.1} parent=1 // pred_region
      %263 = dma.done [#allocation4], 32
    $region33: #{tpu_custom_call.1} parent=1 // pred_fallthru
      _
    %264 = vsyncpa [#allocation3], 1
    %265 = vsyncpa [#allocation6], 1
    %266 = vsyncpa [#allocation4], 1

</llo_original>
